<compile_context>
chip_gen: v5e
topology: v5e:2x2
jax: 0.10.0
libtpu: 0.0.40
codegen_flags: <defaults>
</compile_context>

<pallas_src>
import functools

import jax
import jax.numpy as jnp
from jax.experimental import pallas as pl
from jax.experimental.pallas import tpu as pltpu


# ----------------------------- helpers -------------------------------------

def _round_up(x, m):
    return (x + m - 1) // m * m


def _pick_tile(dim, preferred, want_multi=False):
    """Pick the first tile in `preferred` dividing `dim`; with want_multi,
    prefer tiles that give >= 2 grid programs (megacore / pipelining)."""
    cands = [t for t in preferred if dim % t == 0]
    if not cands:
        return dim
    if want_multi:
        for t in cands:
            if dim // t >= 2:
                return t
    return cands[0]


def _vmem_capacity():
    try:
        return int(pltpu.get_tpu_info().vmem_capacity_bytes)
    except Exception:
        return 64 * 2 ** 20  # conservative (v7x per-core)


def _tn_preferences():
    # v6e/v7x MXU is 2x256x256 -> prefer 256-wide output tiles when the layer
    # is wide enough; v5e (4x128x128) gains nothing from 256 and is HBM-bound.
    try:
        v = pltpu.get_tpu_info().chip_version
        name = getattr(v, "name", str(v)).lower()
        if "5" in name and "6" not in name and "7" not in name:
            return (128,)
    except Exception:
        pass
    return (256, 128)


_VMEM_CAP = _vmem_capacity()
_TN_PREF = _tn_preferences()


def _mk_compiler_params(semantics, block_bytes, scratch_bytes=0):
    """Compute a vmem limit from the double-buffered block footprint, clamped
    generation-aware (v7x has only 64 MiB per TensorCore)."""
    hint = 2 * int(sum(block_bytes)) + int(scratch_bytes) + 2 * 2 ** 20
    limit = int(min(max(hint, 16 * 2 ** 20), 32 * 2 ** 20, _VMEM_CAP // 2))
    return pltpu.CompilerParams(dimension_semantics=tuple(semantics),
                                vmem_limit_bytes=limit)


# ------------------- fused 3x3 stride-1 conv kernels -----------------------
# The im2col is fused: the kernel sees the zero-padded NHWC activation of one
# image (block (1, Ho+2, Wo+2, Cin)) and accumulates the 9 shifted-window tap
# matmuls; no patches tensor ever hits HBM.

def _tap_accumulate(x_ref, w_ref, acc, *, Ho, Wo, Cin):
    for kh in range(3):
        rows = x_ref[0, kh:kh + Ho, :, :]                 # (Ho, Wo+2, Cin)
        for kw in range(3):
            t = kh * 3 + kw
            win = rows[:, kw:kw + Wo, :].reshape(Ho * Wo, Cin)
            acc = acc + jnp.dot(win, w_ref[t * Cin:(t + 1) * Cin, :],
                                preferred_element_type=jnp.float32)
    return acc


def _fused_conv_kernel(x_ref, w_ref, b_ref, out_ref, *, Ho, Wo, Cin, relu):
    """out = conv3x3_s1(x) * bn_scale + bn_bias (scale pre-folded), opt. ReLU."""
    acc = jnp.zeros((Ho * Wo, out_ref.shape[-1]), jnp.float32)
    acc = _tap_accumulate(x_ref, w_ref, acc, Ho=Ho, Wo=Wo, Cin=Cin)
    acc = acc + b_ref[...]
    if relu:
        acc = jnp.maximum(acc, 0.0)
    out_ref[0] = acc.astype(out_ref.dtype)


def _fused_conv_res_kernel(x_ref, w_ref, res_ref, b_ref, out_ref, *, Ho, Wo, Cin):
    """out = relu(conv3x3_s1(x) + bias + identity residual (bf16))."""
    acc = res_ref[0].astype(jnp.float32) + b_ref[...]
    acc = _tap_accumulate(x_ref, w_ref, acc, Ho=Ho, Wo=Wo, Cin=Cin)
    out_ref[0] = jnp.maximum(acc, 0.0).astype(out_ref.dtype)


def _fused_conv_proj_kernel(x_ref, w_ref, xs_ref, ws_ref, b_ref, out_ref,
                            *, Ho, Wo, Cin):
    """out = relu(conv3x3_s1(x) + 1x1-projection shortcut + combined bias)."""
    acc = jnp.dot(xs_ref[0], ws_ref[...],
                  preferred_element_type=jnp.float32) + b_ref[...]
    acc = _tap_accumulate(x_ref, w_ref, acc, Ho=Ho, Wo=Wo, Cin=Cin)
    out_ref[0] = jnp.maximum(acc, 0.0).astype(out_ref.dtype)


def fused_conv3x3(xpad, w_mat, bias, *, out_dtype, tn, relu=True,
                  residual=None, shortcut=None):
    """3x3 stride-1 conv (+folded BN) with im2col fused into the kernel.

    xpad:     (N, Ho+2, Wo+2, Cin) bf16, spatially zero-padded, channel-padded.
    w_mat:    (9*Cin, Co_pad) bf16, BN-scale folded, tap-major rows.
    residual: optional (N, Ho*Wo, Co_pad) bf16 identity shortcut.
    shortcut: optional (xs, ws) pair: xs (N, Ho*Wo, Cs) bf16, ws (Cs, Co_pad).
    """
    N, Hp, Wp, Cin = xpad.shape
    Ho, Wo = Hp - 2, Wp - 2
    Co = w_mat.shape[1]
    out_item = jnp.dtype(out_dtype).itemsize

    x_spec = pl.BlockSpec((1, Hp, Wp, Cin), lambda n, j: (n, 0, 0, 0))
    w_spec = pl.BlockSpec((9 * Cin, tn), lambda n, j: (0, j))
    b_spec = pl.BlockSpec((1, tn), lambda n, j: (0, j))
    out_spec = pl.BlockSpec((1, Ho * Wo, tn), lambda n, j: (n, 0, j))

    args = [xpad, w_mat]
    in_specs = [x_spec, w_spec]
    blk_bytes = [Hp * Wp * Cin * 2, 9 * Cin * tn * 2, tn * 4,
                 Ho * Wo * tn * out_item]

    if residual is not None:
        kernel = functools.partial(_fused_conv_res_kernel, Ho=Ho, Wo=Wo, Cin=Cin)
        args.append(residual)
        in_specs.append(pl.BlockSpec((1, Ho * Wo, tn), lambda n, j: (n, 0, j)))
        blk_bytes.append(Ho * Wo * tn * 2)
    elif shortcut is not None:
        xs, ws = shortcut
        Cs = xs.shape[-1]
        kernel = functools.partial(_fused_conv_proj_kernel, Ho=Ho, Wo=Wo, Cin=Cin)
        args.extend([xs, ws])
        in_specs.extend([pl.BlockSpec((1, Ho * Wo, Cs), lambda n, j: (n, 0, 0)),
                         pl.BlockSpec((Cs, tn), lambda n, j: (0, j))])
        blk_bytes.extend([Ho * Wo * Cs * 2, Cs * tn * 2])
    else:
        kernel = functools.partial(_fused_conv_kernel, Ho=Ho, Wo=Wo, Cin=Cin,
                                   relu=relu)

    args.append(bias)
    in_specs.append(b_spec)

    return pl.pallas_call(
        kernel,
        out_shape=jax.ShapeDtypeStruct((N, Ho * Wo, Co), out_dtype),
        grid=(N, Co // tn),
        in_specs=in_specs,
        out_specs=out_spec,
        compiler_params=_mk_compiler_params(("parallel", "parallel"),
                                            blk_bytes, Ho * Wo * tn * 4),
    )(*args)


# --------------- fallback: K-tiled matmul (stride-2 conv1 only) -------------

def _conv_bn_kernel(p_ref, w_ref, b_ref, out_ref, acc_ref, *, relu):
    """out = (patches @ w_bnfolded) + bias, optional ReLU.  K-tiled."""
    k = pl.program_id(2)

    @pl.when(k == 0)
    def _():
        acc_ref[...] = jnp.zeros_like(acc_ref)

    acc_ref[...] += jnp.dot(p_ref[...], w_ref[...],
                            preferred_element_type=jnp.float32)

    @pl.when(k == pl.num_programs(2) - 1)
    def _():
        acc = acc_ref[...] + b_ref[...]
        if relu:
            acc = jnp.maximum(acc, 0.0)
        out_ref[...] = acc.astype(out_ref.dtype)


def conv_bn_matmul(patches, w, bias, *, relu, out_dtype):
    M, K = patches.shape
    C = w.shape[1]
    M_pad = _round_up(M, 64)
    if M_pad != M:
        patches = jnp.pad(patches, ((0, M_pad - M), (0, 0)))
    tm = _pick_tile(M_pad, (256, 128, 64), want_multi=True)
    tn = _pick_tile(C, _TN_PREF)
    tk = _pick_tile(K, (512, 384, 256, 128))
    out_item = jnp.dtype(out_dtype).itemsize
    blk_bytes = [tm * tk * 2, tk * tn * 2, tn * 4, tm * tn * out_item]

    out = pl.pallas_call(
        functools.partial(_conv_bn_kernel, relu=relu),
        out_shape=jax.ShapeDtypeStruct((M_pad, C), out_dtype),
        grid=(M_pad // tm, C // tn, K // tk),
        in_specs=[
            pl.BlockSpec((tm, tk), lambda i, j, k: (i, k)),
            pl.BlockSpec((tk, tn), lambda i, j, k: (k, j)),
            pl.BlockSpec((1, tn), lambda i, j, k: (0, j)),
        ],
        out_specs=pl.BlockSpec((tm, tn), lambda i, j, k: (i, j)),
        scratch_shapes=[pltpu.VMEM((tm, tn), jnp.float32)],
        compiler_params=_mk_compiler_params(
            ("parallel", "parallel", "arbitrary"), blk_bytes, tm * tn * 4),
    )(patches, w, bias)
    return out[:M]


def _im2col_from_padded(xpad, stride, Ho, Wo):
    """bf16 patches (N*Ho*Wo, 9*Cp) built directly from the pre-padded
    (channel-padded, bf16) activation — no extra pad/cast pass."""
    cols = []
    for kh in range(3):
        for kw in range(3):
            cols.append(xpad[:, kh:kh + stride * Ho:stride,
                             kw:kw + stride * Wo:stride, :])
    p = jnp.concatenate(cols, axis=-1)          # (N, Ho, Wo, 9*Cp)
    return p.reshape(-1, p.shape[-1])


# ------------------------------- params ------------------------------------

def init_params(key, in_planes, planes, stride):
    ks = jax.random.split(key, 16)
    eps = 1e-5
    cin_pad = _round_up(in_planes, 128)
    cout_pad = _round_up(planes, 128)

    def bn_fold(k0, k1, k2, k3, c):
        gamma = 1.0 + 0.1 * jax.random.normal(k0, (c,), jnp.float32)
        beta = 0.1 * jax.random.normal(k1, (c,), jnp.float32)
        mean = 0.1 * jax.random.normal(k2, (c,), jnp.float32)
        var = 0.5 + jax.random.uniform(k3, (c,), jnp.float32)
        scale = gamma / jnp.sqrt(var + eps)
        bias = beta - mean * scale
        return scale, bias

    w1 = 0.1 * jax.random.normal(ks[0], (planes, in_planes, 3, 3), jnp.float32)
    w2 = 0.1 * jax.random.normal(ks[1], (planes, planes, 3, 3), jnp.float32)
    s1, b1 = bn_fold(ks[2], ks[3], ks[4], ks[5], planes)
    s2, b2 = bn_fold(ks[6], ks[7], ks[8], ks[9], planes)

    def fold3x3(w_oihw, scale, ci_pad):
        # OIHW -> (kh, kw, cin, cout), fold BN scale into cout, zero-pad both
        # channel dims, flatten to the tap-major (9*ci_pad, cout_pad) layout.
        m = jnp.transpose(w_oihw, (2, 3, 1, 0)) * scale[None, None, None, :]
        m = jnp.pad(m, ((0, 0), (0, 0),
                        (0, ci_pad - m.shape[2]), (0, cout_pad - m.shape[3])))
        return m.reshape(9 * ci_pad, cout_pad).astype(jnp.bfloat16)

    def pad_bias(b):
        return jnp.pad(b, (0, cout_pad - b.shape[0])).reshape(1, cout_pad)

    proj = (stride != 1) or (in_planes != planes)
    params = {
        "planes": planes, "cin_pad": cin_pad, "cout_pad": cout_pad, "proj": proj,
        # raw params for the pure-JAX reference
        "w1": w1, "w2": w2, "s1": s1, "b1": b1, "s2": s2, "b2": b2,
        # kernel-ready (BN-scale-folded, zero-padded, bf16) matrices
        "w1_mat": fold3x3(w1, s1, cin_pad),
        "w2_mat": fold3x3(w2, s2, cout_pad),
        "b1_pad": pad_bias(b1),
        "b2_pad": pad_bias(b2),
    }
    if proj:  # option 'B' shortcut: 1x1 conv + BN
        ws = 0.1 * jax.random.normal(ks[10], (planes, in_planes, 1, 1), jnp.float32)
        ss, bs = bn_fold(ks[11], ks[12], ks[13], ks[14], planes)
        ws_mat = ws[:, :, 0, 0].T * ss[None, :]
        ws_mat = jnp.pad(ws_mat, ((0, cin_pad - in_planes), (0, cout_pad - planes)))
        params.update({
            "ws": ws, "ss": ss, "bs": bs,
            "ws_mat": ws_mat.astype(jnp.bfloat16),
            "b2s_pad": pad_bias(b2 + bs),     # combined bias for fused epilogue
        })
    return params


# ------------------------------- forward -----------------------------------

def basic_block_forward(x_nchw, params, stride):
    """Pallas implementation of BasicBlock.forward (input/output NCHW)."""
    x = jnp.transpose(x_nchw, (0, 2, 3, 1)).astype(jnp.float32)   # -> NHWC
    N, H, W, Cin = x.shape
    planes = params["planes"]
    cin_pad, cout_pad = params["cin_pad"], params["cout_pad"]
    Ho, Wo = H // stride, W // stride
    tn = _pick_tile(cout_pad, _TN_PREF)

    # Single pass over x: spatial zero-pad (3x3 halo) + channel pad + bf16 cast.
    xpad = jnp.pad(x, ((0, 0), (1, 1), (1, 1), (0, cin_pad - Cin))).astype(jnp.bfloat16)

    # ---- conv1 (3x3, stride) + bn1 + relu -> bf16 (N, Ho*Wo, cout_pad) ----
    if stride == 1:
        out1 = fused_conv3x3(xpad, params["w1_mat"], params["b1_pad"],
                             out_dtype=jnp.bfloat16, tn=tn, relu=True)
    else:
        # TODO(synk): fuse the strided im2col as well (space-to-depth phase
        # split of xpad) instead of materializing bf16 patches here.
        patches = _im2col_from_padded(xpad, stride, Ho, Wo)
        out1 = conv_bn_matmul(patches, params["w1_mat"], params["b1_pad"],
                              relu=True, out_dtype=jnp.bfloat16)
        out1 = out1.reshape(N, Ho * Wo, cout_pad)

    # ---- conv2 (3x3, stride 1) + bn2 + shortcut + relu: one fused kernel ----
    out1_pad = jnp.pad(out1.reshape(N, Ho, Wo, cout_pad),
                       ((0, 0), (1, 1), (1, 1), (0, 0)))           # bf16 halo

    if params["proj"]:
        # 1x1 stride-s shortcut patches (tiny, bf16) fused as a 10th matmul.
        xs = xpad[:, 1::stride, 1::stride, :][:, :Ho, :Wo, :]
        xs = xs.reshape(N, Ho * Wo, cin_pad)
        out = fused_conv3x3(out1_pad, params["w2_mat"], params["b2s_pad"],
                            out_dtype=jnp.float32, tn=tn,
                            shortcut=(xs, params["ws_mat"]))
    else:
        # identity shortcut: bf16 residual added in the epilogue.
        res = xpad[:, 1:1 + H, 1:1 + W, :].reshape(N, Ho * Wo, cin_pad)
        out = fused_conv3x3(out1_pad, params["w2_mat"], params["b2_pad"],
                            out_dtype=jnp.float32, tn=tn, residual=res)

    out = out.reshape(N, Ho, Wo, cout_pad)[:, :, :, :planes]
    return jnp.transpose(out, (0, 3, 1, 2))  # -> NCHW


# ------------------------------ reference ----------------------------------

def ref_forward(x_nchw, params, stride):
    """Pure-JAX reference (lax.conv) emulating bf16 inputs / f32 accumulation."""
    def rt(a):  # round-trip through bf16, like the kernel's matmul inputs
        return a.astype(jnp.bfloat16).astype(jnp.float32)

    x = jnp.transpose(x_nchw, (0, 2, 3, 1))
    dn = ("NHWC", "HWIO", "NHWC")

    def conv(inp, w_oihw, scale, st, pad):
        w = w_oihw * scale[:, None, None, None]   # fold BN scale (as in kernel prep)
        w = jnp.transpose(w, (2, 3, 1, 0))
        return jax.lax.conv_general_dilated(
            rt(inp), rt(w), (st, st), [(pad, pad), (pad, pad)],
            dimension_numbers=dn, preferred_element_type=jnp.float32)

    out = jnp.maximum(conv(x, params["w1"], params["s1"], stride, 1) + params["b1"], 0.0)
    out = conv(out, params["w2"], params["s2"], 1, 1) + params["b2"]
    if params["proj"]:
        short = conv(x, params["ws"], params["ss"], stride, 0) + params["bs"]
    else:
        short = rt(x)                              # kernel keeps the residual in bf16
    out = jnp.maximum(out + short, 0.0)
    return jnp.transpose(out, (0, 3, 1, 2))


if __name__ == "__main__":
    key = jax.random.PRNGKey(0)
    N, H, W = 2, 16, 16
    configs = [
        (4, 8, 2),   # option-'B' projection shortcut: im2col conv1 + fused conv2+proj
        (8, 8, 1),   # identity shortcut: both convs fully fused (no im2col in HBM)
    ]

    ok = True
    for idx, (cin, planes, stride) in enumerate(configs):
        kx, kp = jax.random.split(jax.random.fold_in(key, idx))
        x = jax.random.normal(kx, (N, cin, H, W), jnp.float32)   # NCHW like PyTorch
        params = init_params(kp, cin, planes, stride)

        out = jax.block_until_ready(basic_block_forward(x, params, stride))
        assert out.shape == (N, planes, H // stride, W // stride), out.shape

        ref = ref_forward(x, params, stride)
        err = float(jnp.max(jnp.abs(out - ref)))
        if err > 1e-2:
            ok = False
            print(f"config {idx} (cin={cin}, planes={planes}, stride={stride}): "
                  f"max abs err = {err}")

    if ok:
        print("KERNEL_OK")
    else:
        raise SystemExit("numerical mismatch")
</pallas_src>

<mosaic_0001>
module attributes {stable_mosaic.version = 11 : i64} {
  func.func @_conv_bn_kernel(%arg0: i32, %arg1: i32, %arg2: i32, %arg3: memref<64x384xbf16, #tpu.memory_space<vmem>>, %arg4: memref<384x128xbf16, #tpu.memory_space<vmem>>, %arg5: memref<1x128xf32, #tpu.memory_space<vmem>>, %arg6: memref<64x128xbf16, #tpu.memory_space<vmem>>, %arg7: memref<64x128xf32, #tpu.memory_space<vmem>>) attributes {dimension_semantics = [#tpu.dimension_semantics<parallel>, #tpu.dimension_semantics<parallel>, #tpu.dimension_semantics<arbitrary>], iteration_bounds = array<i64: 2, 1, 3>, scalar_prefetch = 0 : i64, scratch_operands = 1 : i64, tpu.core_type = #tpu.core_type<tc>, window_params = [{transform_indices = @transform_0, window_bounds = array<i64: 64, 384>}, {transform_indices = @transform_1, window_bounds = array<i64: 384, 128>}, {transform_indices = @transform_2, window_bounds = array<i64: 1, 128>}, {transform_indices = @transform_3, window_bounds = array<i64: 64, 128>}]} {
    %c0_i32 = arith.constant 0 : i32
    %0 = arith.cmpi eq, %arg2, %c0_i32 : i32
    %1 = arith.extui %0 : i1 to i32
    %c0_i32_0 = arith.constant 0 : i32
    %2 = arith.cmpi ne, %1, %c0_i32_0 : i32
    scf.if %2 {
      %cst_9 = arith.constant 0.000000e+00 : f32
      %12 = vector.broadcast %cst_9 : f32 to vector<64x128xf32>
      %c0_10 = arith.constant 0 : index
      %c0_11 = arith.constant 0 : index
      %13 = vector.load %arg7[%c0_10, %c0_11] : memref<64x128xf32, #tpu.memory_space<vmem>>, vector<64x128xf32>
      tpu.vector_store %arg7[%c0_10, %c0_11], %12 {strides = array<i32>} : memref<64x128xf32, #tpu.memory_space<vmem>>, vector<64x128xf32>,
    } else {
    }
    %c0 = arith.constant 0 : index
    %c0_1 = arith.constant 0 : index
    %3 = vector.load %arg7[%c0, %c0_1] : memref<64x128xf32, #tpu.memory_space<vmem>>, vector<64x128xf32>
    %c0_2 = arith.constant 0 : index
    %c0_3 = arith.constant 0 : index
    %4 = vector.load %arg3[%c0_2, %c0_3] : memref<64x384xbf16, #tpu.memory_space<vmem>>, vector<64x384xbf16>
    %c0_4 = arith.constant 0 : index
    %c0_5 = arith.constant 0 : index
    %5 = vector.load %arg4[%c0_4, %c0_5] : memref<384x128xbf16, #tpu.memory_space<vmem>>, vector<384x128xbf16>
    %cst = arith.constant dense<0.000000e+00> : vector<64x128xf32>
    %6 = tpu.matmul %4, %5, %cst {dimension_numbers = #tpu.dot_dimension_numbers<[1], [0], [0], [1], [0, 0, 1, 1], [], []>} : vector<64x384xbf16>, vector<384x128xbf16>, vector<64x128xf32> -> vector<64x128xf32>
    %7 = arith.addf %3, %6 : vector<64x128xf32>
    %c0_6 = arith.constant 0 : index
    %c0_7 = arith.constant 0 : index
    %8 = vector.load %arg7[%c0_6, %c0_7] : memref<64x128xf32, #tpu.memory_space<vmem>>, vector<64x128xf32>
    tpu.vector_store %arg7[%c0_6, %c0_7], %7 {strides = array<i32>} : memref<64x128xf32, #tpu.memory_space<vmem>>, vector<64x128xf32>,
    %c2_i32 = arith.constant 2 : i32
    %9 = arith.cmpi eq, %arg2, %c2_i32 : i32
    %10 = arith.extui %9 : i1 to i32
    %c0_i32_8 = arith.constant 0 : i32
    %11 = arith.cmpi ne, %10, %c0_i32_8 : i32
    scf.if %11 {
      %c0_9 = arith.constant 0 : index
      %c0_10 = arith.constant 0 : index
      %12 = vector.load %arg7[%c0_9, %c0_10] : memref<64x128xf32, #tpu.memory_space<vmem>>, vector<64x128xf32>
      %c0_11 = arith.constant 0 : index
      %c0_12 = arith.constant 0 : index
      %13 = vector.load %arg5[%c0_11, %c0_12] : memref<1x128xf32, #tpu.memory_space<vmem>>, vector<1x128xf32>
      %14 = vector.broadcast %13 : vector<1x128xf32> to vector<64x128xf32>
      %15 = arith.addf %12, %14 : vector<64x128xf32>
      %cst_13 = arith.constant 0.000000e+00 : f32
      %16 = vector.broadcast %cst_13 : f32 to vector<64x128xf32>
      %17 = arith.maximumf %15, %16 : vector<64x128xf32>
      %18 = arith.truncf %17 : vector<64x128xf32> to vector<64x128xbf16>
      %c0_14 = arith.constant 0 : index
      %c0_15 = arith.constant 0 : index
      %19 = vector.load %arg6[%c0_14, %c0_15] : memref<64x128xbf16, #tpu.memory_space<vmem>>, vector<64x128xbf16>
      tpu.vector_store %arg6[%c0_14, %c0_15], %18 {strides = array<i32>} : memref<64x128xbf16, #tpu.memory_space<vmem>>, vector<64x128xbf16>,
    } else {
    }
    return
  }
  func.func @transform_0(%arg0: i32, %arg1: i32, %arg2: i32) -> (i32, i32) {
    %c0_i32 = arith.constant 0 : i32
    return %arg0, %arg2 : i32, i32
  }
  func.func @transform_1(%arg0: i32, %arg1: i32, %arg2: i32) -> (i32, i32) {
    %c0_i32 = arith.constant 0 : i32
    return %arg2, %arg1 : i32, i32
  }
  func.func @transform_2(%arg0: i32, %arg1: i32, %arg2: i32) -> (i32, i32) {
    %c0_i32 = arith.constant 0 : i32
    %c0_i32_0 = arith.constant 0 : i32
    return %c0_i32, %arg1 : i32, i32
  }
  func.func @transform_3(%arg0: i32, %arg1: i32, %arg2: i32) -> (i32, i32) {
    %c0_i32 = arith.constant 0 : i32
    return %arg0, %arg1 : i32, i32
  }
}

</mosaic_0001>

<llo_original>
// kernel: tpu_custom_call.1
$region0: #{tpu_custom_call.1}
  #allocation0 [shape = 'u32[]', space=smem, size = 0x4, offset = 0x4, fixed_abs, tag = 'smem constant byte address 0x4 - core index']
  #allocation1 [shape = 'u32[72,128]{1,0:T(1,128)}', space=vmem, size = 0x9000, scoped, tag = 'internal scratch']
  #allocation2 [shape = 'f32[64,128]{1,0:T(8,128)}', space=vmem, size = 0x8000, scoped, tag = 'scratch operand']
  %s0 = inlined_call_operand.hbm [shape: bf16[128,1152], index: 0, kind: input, shape index: {}]
  %s1 = inlined_call_operand.hbm [shape: bf16[1152,128], index: 1, kind: input, shape index: {}]
  %s2 = inlined_call_operand.vmem [shape: f32[1,128], index: 2, kind: input, shape index: {}]
  %s3 = inlined_call_operand.hbm [shape: bf16[128,128], index: 3, kind: output, shape index: {}]
  %s4 = sld [smem:[#allocation0]]
  $region61: #{tpu_custom_call.1} parent=0
    _
  %s6 = ssub.s32 1, %s4
  %s7 = scalar_select 0, %s6, %s4
  $region1: #{tpu_custom_call.1} parent=0
    #allocation3 [shape = 'u8[98304]{0}', space=vmem, size = 0x18000, scoped, tag = 'input window, operand 0']
    #allocation4 [shape = 's32[2]{0}', space=sflag, size = 0x8, scoped, tag = 'scoped memory for tpu_custom_call.1']
    #allocation5 [shape = 's32[2]{0}', space=sflag, size = 0x8, scoped, tag = 'scoped memory for tpu_custom_call.1']
    #allocation6 [shape = 'u8[196608]{0}', space=vmem, size = 0x30000, scoped, tag = 'input window, operand 1']
    #allocation7 [shape = 's32[2]{0}', space=sflag, size = 0x8, scoped, tag = 'scoped memory for tpu_custom_call.1']
    #allocation8 [shape = 'u8[32768]{0}', space=vmem, size = 0x8000, scoped, tag = 'output window, operand 0']
    %8 = vsyncpa [#allocation4], 0
    %s9 = scalar_lea.sflag [#allocation4], 1
    %10 = vsyncpa %s9, 0
    %11 = vsyncpa [#allocation7], 0
    %s12 = scalar_lea.sflag [#allocation7], 1
    %13 = vsyncpa %s12, 0
    %14 = vsyncpa [#allocation5], 0
    %s15 = scalar_lea.sflag [#allocation5], 1
    %16 = vsyncpa %s15, 0
    loop: start=0, step=1, limit=8
    $region2: #{tpu_custom_call.1} parent=1 // loop_pre_header
      _
    $region3: #{tpu_custom_call.1} parent=1 // loop_header
      %s18 = sphi 0, %s22
      %p19 = scmp.ge.s32.totalorder %s18, 8
      %s25 = sphi 0, %s44
      %s26 = sphi 0, %s40
      %s27 = sphi 0, %s36
      %s28 = sphi 0, %s25
      %s29 = sphi 0, %s26
      %s30 = sphi 0, %s27
      %s31 = sphi 0, %s28
      %s32 = sphi 0, %s29
      %s33 = sphi 0, %s30
      %s49 = sphi 0, %s51
      %s52 = sphi 0, %s49
      %s53 = sphi 0, %s52
      %s69 = sphi 0, %s53
      %s77 = sphi 0, %s79
      %s80 = sphi 0, %s77
      %s81 = sphi 0, %s80
      %s97 = sphi 0, %s81
      %s103 = sphi 0, %s105
      %s106 = sphi 0, %s103
      %s107 = sphi 0, %s106
      %s123 = sphi 0, %s107
      %s131 = sphi 0, %s133
      %s134 = sphi 0, %s131
      %s135 = sphi 0, %s134
      %s151 = sphi 0, %s135
    $region4: #{tpu_custom_call.1} parent=1 // loop_header_branch
      %21 = sbr.rel (%p19) target = $region8
    $region5: #{tpu_custom_call.1} parent=1 // loop_body
      %s23 = ssub.s32 %s18, 1
      %s24 = ssub.s32 %s18, 2
      %s34 = sadd.s32 1, %s27
      %p35 = scmp.ge.s32.totalorder %s34, 3
      %s36 = scalar_select %p35, 0, %s34
      %s37 = sadd.s32 1, %s26
      %s38 = scalar_select %p35, %s37, %s26
      %p39 = scmp.ge.s32.totalorder %s38, 1
      %s40 = scalar_select %p39, 0, %s38
      %s41 = sadd.s32 1, %s25
      %s42 = scalar_select %p39, %s41, %s25
      %p43 = scmp.ge.s32.totalorder %s42, 2
      %s44 = scalar_select %p43, 0, %s42
      %s45 = ssub.s32 %s25, %s44
      %s46 = ssub.s32 %s27, %s36
      %s47 = sor.u32 %s45, %s46
      %p48 = scmp.eq.s32.totalorder %s47, 0
      %s50 = sadd.s32 %s49, 1
      %s51 = scalar_select %p48, %s49, %s50
      %p54 = pneg %p48
      %p55 = scmp.eq.s32.totalorder %s18, 5
      %p56 = por %p54, %p55
      %p57 = scmp.ne.s32.totalorder %s49, %s52
      %p58 = scmp.eq.s32.totalorder %s18, 0
      %p59 = por %p57, %p58
      %p60 = scmp.ne.s32.totalorder %s49, %s52
      %p61 = scmp.eq.s32.totalorder %s23, 5
      %p62 = por %p60, %p61
      %p63 = scmp.ne.s32.totalorder %s52, %s53
      %p64 = scmp.eq.s32.totalorder %s23, 0
      %p65 = por %p63, %p64
      %p66 = scmp.ne.s32.totalorder %s52, %s53
      %p67 = scmp.eq.s32.totalorder %s24, 5
      %p68 = por %p66, %p67
      %p70 = scmp.ne.s32.totalorder %s53, %s69
      %p71 = scmp.eq.s32.totalorder %s24, 0
      %p72 = por %p70, %p71
      %s73 = ssub.s32 %s27, %s36
      %s74 = ssub.s32 %s26, %s40
      %s75 = sor.u32 %s73, %s74
      %p76 = scmp.eq.s32.totalorder %s75, 0
      %s78 = sadd.s32 %s77, 1
      %s79 = scalar_select %p76, %s77, %s78
      %p82 = pneg %p76
      %p83 = scmp.eq.s32.totalorder %s18, 5
      %p84 = por %p82, %p83
      %p85 = scmp.ne.s32.totalorder %s77, %s80
      %p86 = scmp.eq.s32.totalorder %s18, 0
      %p87 = por %p85, %p86
      %p88 = scmp.ne.s32.totalorder %s77, %s80
      %p89 = scmp.eq.s32.totalorder %s23, 5
      %p90 = por %p88, %p89
      %p91 = scmp.ne.s32.totalorder %s80, %s81
      %p92 = scmp.eq.s32.totalorder %s23, 0
      %p93 = por %p91, %p92
      %p94 = scmp.ne.s32.totalorder %s80, %s81
      %p95 = scmp.eq.s32.totalorder %s24, 5
      %p96 = por %p94, %p95
      %p98 = scmp.ne.s32.totalorder %s81, %s97
      %p99 = scmp.eq.s32.totalorder %s24, 0
      %p100 = por %p98, %p99
      %s101 = ssub.s32 %s26, %s40
      %p102 = scmp.eq.s32.totalorder %s101, 0
      %s104 = sadd.s32 %s103, 1
      %s105 = scalar_select %p102, %s103, %s104
      %p108 = pneg %p102
      %p109 = scmp.eq.s32.totalorder %s18, 5
      %p110 = por %p108, %p109
      %p111 = scmp.ne.s32.totalorder %s103, %s106
      %p112 = scmp.eq.s32.totalorder %s18, 0
      %p113 = por %p111, %p112
      %p114 = scmp.ne.s32.totalorder %s103, %s106
      %p115 = scmp.eq.s32.totalorder %s23, 5
      %p116 = por %p114, %p115
      %p117 = scmp.ne.s32.totalorder %s106, %s107
      %p118 = scmp.eq.s32.totalorder %s23, 0
      %p119 = por %p117, %p118
      %p120 = scmp.ne.s32.totalorder %s106, %s107
      %p121 = scmp.eq.s32.totalorder %s24, 5
      %p122 = por %p120, %p121
      %p124 = scmp.ne.s32.totalorder %s107, %s123
      %p125 = scmp.eq.s32.totalorder %s24, 0
      %p126 = por %p124, %p125
      %s127 = ssub.s32 %s25, %s44
      %s128 = ssub.s32 %s26, %s40
      %s129 = sor.u32 %s127, %s128
      %p130 = scmp.eq.s32.totalorder %s129, 0
      %s132 = sadd.s32 %s131, 1
      %s133 = scalar_select %p130, %s131, %s132
      %p136 = pneg %p130
      %p137 = scmp.eq.s32.totalorder %s18, 5
      %p138 = por %p136, %p137
      %p139 = scmp.ne.s32.totalorder %s131, %s134
      %p140 = scmp.eq.s32.totalorder %s18, 0
      %p141 = por %p139, %p140
      %p142 = scmp.ne.s32.totalorder %s131, %s134
      %p143 = scmp.eq.s32.totalorder %s23, 5
      %p144 = por %p142, %p143
      %p145 = scmp.ne.s32.totalorder %s134, %s135
      %p146 = scmp.eq.s32.totalorder %s23, 0
      %p147 = por %p145, %p146
      %p148 = scmp.ne.s32.totalorder %s134, %s135
      %p149 = scmp.eq.s32.totalorder %s24, 5
      %p150 = por %p148, %p149
      %p152 = scmp.ne.s32.totalorder %s135, %s151
      %p153 = scmp.eq.s32.totalorder %s24, 0
      %p154 = por %p152, %p153
      %p155 = scmp.le.s32.totalorder 1, %s18
      %p156 = scmp.lt.s32.totalorder %s18, 7
      %p157 = pnand %p155, %p156
      %p158 = pneg %p157
      // Predicated region
      $region9: #{tpu_custom_call.1} parent=5 // pred_check
        _
      $region10: #{tpu_custom_call.1} parent=5 // pred_check_branch
        %160 = sbr.rel (%p157) target = $region12
      $region11: #{tpu_custom_call.1} parent=5 // pred_region
        %s161 = ssub.s32 %s18, 1
        // Predicated region
        $region13: #{tpu_custom_call.1} parent=11 // pred_check
          %p162 = pneg %p119
        $region14: #{tpu_custom_call.1} parent=11 // pred_check_branch
          %164 = sbr.rel (%p162) target = $region16
        $region15: #{tpu_custom_call.1} parent=11 // pred_region
          %p165 = scmp.lt.s32.totalorder %s29, 0
          %s166 = scalar_select %p165, %s29, 0
          %s167 = scalar_lea.vmem %s2, %s166
        $region16: #{tpu_custom_call.1} parent=11 // pred_fallthru
          _
      $region12: #{tpu_custom_call.1} parent=5 // pred_fallthru
        _
      %p168 = scmp.lt.s32.totalorder %s18, 6
      // Predicated region
      $region17: #{tpu_custom_call.1} parent=5 // pred_check
        %p169 = pneg %p168
      $region18: #{tpu_custom_call.1} parent=5 // pred_check_branch
        %171 = sbr.rel (%p169) target = $region20
      $region19: #{tpu_custom_call.1} parent=5 // pred_region
        // Predicated region
        $region21: #{tpu_custom_call.1} parent=19 // pred_check
          %p172 = pneg %p59
        $region22: #{tpu_custom_call.1} parent=19 // pred_check_branch
          %174 = sbr.rel (%p172) target = $region24
        $region23: #{tpu_custom_call.1} parent=19 // pred_region
          %s175 = sand.u32 %s49, 1
          %s176 = scalar_lea.sflag [#allocation4], %s175
          %s177 = sand.u32 %s49, 1
          %s178 = smul.addr %s177, 96
          %s179 = scalar_lea.vmem [#allocation3], %s178
          %s180 = smul.u32 8, %s25
          %s181 = smul.u32 3, %s27
          %183 = vsyncadd %s176, 0
          %s184 = smul.addr %s180, 9
          %s185 = sadd.s32 %s181, %s184
          %s186 = smul.addr %s185, 4
          %s187 = scalar_lea.hbm %s0, %s186
          %s188 = sshll.u32 %s187, 4
          %s189 = int_to_ptr.hbm [resolvable:$true] %s188
          %s190 = sshll.u32 %s179, 4
          %s191 = int_to_ptr.vmem [resolvable:$true] %s190
          %196 = dma.hbm_to_vmem [thread:$0]  %s189, 1536, %s191, %s176, 576, 192, 12
        $region24: #{tpu_custom_call.1} parent=19 // pred_fallthru
          _
        // Predicated region
        $region25: #{tpu_custom_call.1} parent=19 // pred_check
          %p197 = pneg %p87
        $region26: #{tpu_custom_call.1} parent=19 // pred_check_branch
          %199 = sbr.rel (%p197) target = $region28
        $region27: #{tpu_custom_call.1} parent=19 // pred_region
          %s200 = sand.u32 %s77, 1
          %s201 = scalar_lea.sflag [#allocation7], %s200
          %s202 = sand.u32 %s77, 1
          %s203 = smul.addr %s202, 192
          %s204 = scalar_lea.vmem [#allocation6], %s203
          %s205 = smul.u32 48, %s27
          %207 = vsyncadd %s201, 0
          %s208 = sadd.s32 %s26, %s205
          %s209 = smul.addr %s208, 4
          %s210 = scalar_lea.hbm %s1, %s209
          %s211 = sshll.u32 %s210, 4
          %s212 = int_to_ptr.hbm [resolvable:$true] %s211
          %s213 = sshll.u32 %s204, 4
          %s214 = int_to_ptr.vmem [resolvable:$true] %s213
          %219 = dma.hbm_to_vmem [thread:$0]  %s212, 3072, %s214, %s201, 64, 64, 4
        $region28: #{tpu_custom_call.1} parent=19 // pred_fallthru
          _
      $region20: #{tpu_custom_call.1} parent=5 // pred_fallthru
        _
      %p220 = scmp.le.s32.totalorder 1, %s18
      %p221 = scmp.lt.s32.totalorder %s18, 7
      %p222 = pnand %p220, %p221
      %p223 = pneg %p222
      // Predicated region
      $region29: #{tpu_custom_call.1} parent=5 // pred_check
        _
      $region30: #{tpu_custom_call.1} parent=5 // pred_check_branch
        %225 = sbr.rel (%p222) target = $region32
      $region31: #{tpu_custom_call.1} parent=5 // pred_region
        %s226 = ssub.s32 %s18, 1
        %s227 = sand.u32 %s52, 1
        %s228 = scalar_lea.sflag [#allocation4], %s227
        %s229 = sand.u32 %s52, 1
        %s230 = smul.addr %s229, 96
        %s231 = scalar_lea.vmem [#allocation3], %s230
        // Predicated region
        $region33: #{tpu_custom_call.1} parent=31 // pred_check
          %p232 = pneg %p65
        $region34: #{tpu_custom_call.1} parent=31 // pred_check_branch
          %234 = sbr.rel (%p232) target = $region36
        $region35: #{tpu_custom_call.1} parent=31 // pred_region
          %236 = dma.done %s228, 1536
        $region36: #{tpu_custom_call.1} parent=31 // pred_fallthru
          _
        %s237 = sand.u32 %s80, 1
        %s238 = scalar_lea.sflag [#allocation7], %s237
        %s239 = sand.u32 %s80, 1
        %s240 = smul.addr %s239, 192
        %s241 = scalar_lea.vmem [#allocation6], %s240
        // Predicated region
        $region37: #{tpu_custom_call.1} parent=31 // pred_check
          %p242 = pneg %p93
        $region38: #{tpu_custom_call.1} parent=31 // pred_check_branch
          %244 = sbr.rel (%p242) target = $region40
        $region39: #{tpu_custom_call.1} parent=31 // pred_region
          %246 = dma.done %s238, 3072
        $region40: #{tpu_custom_call.1} parent=31 // pred_fallthru
          _
        %s247 = sand.u32 %s52, 1
        %s248 = scalar_lea.sflag [#allocation4], %s247
        %s249 = sand.u32 %s52, 1
        %s250 = smul.addr %s249, 96
        %s251 = scalar_lea.vmem [#allocation3], %s250
        %p252 = pneg %p65
        %p253 = pneg %p62
        %s254 = sand.u32 %s80, 1
        %s255 = scalar_lea.sflag [#allocation7], %s254
        %s256 = sand.u32 %s80, 1
        %s257 = smul.addr %s256, 192
        %s258 = scalar_lea.vmem [#allocation6], %s257
        %p259 = pneg %p93
        %p260 = pneg %p90
        %p261 = scmp.lt.s32.totalorder %s29, 0
        %s262 = scalar_select %p261, %s29, 0
        %s263 = scalar_lea.vmem %s2, %s262
        %p264 = pneg %p119
        %p265 = pneg %p116
        %p266 = pneg %p147
        %p267 = pneg %p144
        %s268 = sand.u32 %s134, 1
        %s269 = scalar_lea.sflag [#allocation5], %s268
        %s270 = sand.u32 %s134, 1
        %s271 = smul.addr %s270, 32
        %s272 = scalar_lea.vmem [#allocation8], %s271
        %s273 = smul.u32 8, %s28
        %s274 = smul.u32 3, %s30
        %s275 = smul.u32 48, %s30
        %p276 = scmp.lt.s32.totalorder %s29, 0
        %s277 = scalar_select %p276, %s29, 0
        %s278 = scalar_lea.vmem %s2, %s277
        %s279 = smul.u32 8, %s28
        %p280 = scmp.eq.s32.totalorder %s30, 0
        // Predicated region
        $region41: #{tpu_custom_call.1} parent=31 // pred_check
          %p281 = pneg %p280
        $region42: #{tpu_custom_call.1} parent=31 // pred_check_branch
          %283 = sbr.rel (%p281) target = $region44
        $region43: #{tpu_custom_call.1} parent=31 // pred_region
          %284 = vst [vmem:[#allocation2] sm:$0xff] 0.0
          %285 = vst [vmem:[#allocation2 + $0x8] sm:$0xff] 0.0
          %286 = vst [vmem:[#allocation2 + $0x10] sm:$0xff] 0.0
          %287 = vst [vmem:[#allocation2 + $0x18] sm:$0xff] 0.0
          %288 = vst [vmem:[#allocation2 + $0x20] sm:$0xff] 0.0
          %289 = vst [vmem:[#allocation2 + $0x28] sm:$0xff] 0.0
          %290 = vst [vmem:[#allocation2 + $0x30] sm:$0xff] 0.0
          %291 = vst [vmem:[#allocation2 + $0x38] sm:$0xff] 0.0
        $region44: #{tpu_custom_call.1} parent=31 // pred_fallthru
          _
        %v292 = vld [vmem:[#allocation2] sm:$0xff]
        %v293 = vld [vmem:[#allocation2 + $0x8] sm:$0xff]
        %v294 = vld [vmem:[#allocation2 + $0x10] sm:$0xff]
        %v295 = vld [vmem:[#allocation2 + $0x18] sm:$0xff]
        %v296 = vld [vmem:[#allocation2 + $0x20] sm:$0xff]
        %v297 = vld [vmem:[#allocation2 + $0x28] sm:$0xff]
        %v298 = vld [vmem:[#allocation2 + $0x30] sm:$0xff]
        %v299 = vld [vmem:[#allocation2 + $0x38] sm:$0xff]
        %v300 = vld [vmem:[%s231] sm:$0xff]
        %v301 = vld [vmem:[%s231 + $0x8] sm:$0xf]
        %v302 = vld [vmem:[%s231 + $0xc] sm:$0xff]
        %v303 = vld [vmem:[%s231 + $0x14] sm:$0xf]
        %v304 = vld [vmem:[%s231 + $0x18] sm:$0xff]
        %v305 = vld [vmem:[%s231 + $0x20] sm:$0xf]
        %v306 = vld [vmem:[%s231 + $0x24] sm:$0xff]
        %v307 = vld [vmem:[%s231 + $0x2c] sm:$0xf]
        %v308 = vld [vmem:[%s231 + $0x30] sm:$0xff]
        %v309 = vld [vmem:[%s231 + $0x38] sm:$0xf]
        %v310 = vld [vmem:[%s231 + $0x3c] sm:$0xff]
        %v311 = vld [vmem:[%s231 + $0x44] sm:$0xf]
        %v312 = vld [vmem:[%s231 + $0x48] sm:$0xff]
        %v313 = vld [vmem:[%s231 + $0x50] sm:$0xf]
        %v314 = vld [vmem:[%s231 + $0x54] sm:$0xff]
        %v315 = vld [vmem:[%s231 + $0x5c] sm:$0xf]
        %v316 = vld [vmem:[%s241] sm:$0xf]
        %v317 = vld [vmem:[%s241 + $0x4] sm:$0xf]
        %v318 = vld [vmem:[%s241 + $0x8] sm:$0xf]
        %v319 = vld [vmem:[%s241 + $0xc] sm:$0xf]
        %v320 = vld [vmem:[%s241 + $0x10] sm:$0xf]
        %v321 = vld [vmem:[%s241 + $0x14] sm:$0xf]
        %v322 = vld [vmem:[%s241 + $0x18] sm:$0xf]
        %v323 = vld [vmem:[%s241 + $0x1c] sm:$0xf]
        %v324 = vld [vmem:[%s241 + $0x20] sm:$0xf]
        %v325 = vld [vmem:[%s241 + $0x24] sm:$0xf]
        %v326 = vld [vmem:[%s241 + $0x28] sm:$0xf]
        %v327 = vld [vmem:[%s241 + $0x2c] sm:$0xf]
        %v328 = vld [vmem:[%s241 + $0x30] sm:$0xf]
        %v329 = vld [vmem:[%s241 + $0x34] sm:$0xf]
        %v330 = vld [vmem:[%s241 + $0x38] sm:$0xf]
        %v331 = vld [vmem:[%s241 + $0x3c] sm:$0xf]
        %v332 = vld [vmem:[%s241 + $0x40] sm:$0xf]
        %v333 = vld [vmem:[%s241 + $0x44] sm:$0xf]
        %v334 = vld [vmem:[%s241 + $0x48] sm:$0xf]
        %v335 = vld [vmem:[%s241 + $0x4c] sm:$0xf]
        %v336 = vld [vmem:[%s241 + $0x50] sm:$0xf]
        %v337 = vld [vmem:[%s241 + $0x54] sm:$0xf]
        %v338 = vld [vmem:[%s241 + $0x58] sm:$0xf]
        %v339 = vld [vmem:[%s241 + $0x5c] sm:$0xf]
        %v340 = vld [vmem:[%s241 + $0x60] sm:$0xf]
        %v341 = vld [vmem:[%s241 + $0x64] sm:$0xf]
        %v342 = vld [vmem:[%s241 + $0x68] sm:$0xf]
        %v343 = vld [vmem:[%s241 + $0x6c] sm:$0xf]
        %v344 = vld [vmem:[%s241 + $0x70] sm:$0xf]
        %v345 = vld [vmem:[%s241 + $0x74] sm:$0xf]
        %v346 = vld [vmem:[%s241 + $0x78] sm:$0xf]
        %v347 = vld [vmem:[%s241 + $0x7c] sm:$0xf]
        %v348 = vld [vmem:[%s241 + $0x80] sm:$0xf]
        %v349 = vld [vmem:[%s241 + $0x84] sm:$0xf]
        %v350 = vld [vmem:[%s241 + $0x88] sm:$0xf]
        %v351 = vld [vmem:[%s241 + $0x8c] sm:$0xf]
        %v352 = vld [vmem:[%s241 + $0x90] sm:$0xf]
        %v353 = vld [vmem:[%s241 + $0x94] sm:$0xf]
        %v354 = vld [vmem:[%s241 + $0x98] sm:$0xf]
        %v355 = vld [vmem:[%s241 + $0x9c] sm:$0xf]
        %v356 = vld [vmem:[%s241 + $0xa0] sm:$0xf]
        %v357 = vld [vmem:[%s241 + $0xa4] sm:$0xf]
        %v358 = vld [vmem:[%s241 + $0xa8] sm:$0xf]
        %v359 = vld [vmem:[%s241 + $0xac] sm:$0xf]
        %v360 = vld [vmem:[%s241 + $0xb0] sm:$0xf]
        %v361 = vld [vmem:[%s241 + $0xb4] sm:$0xf]
        %v362 = vld [vmem:[%s241 + $0xb8] sm:$0xf]
        %v363 = vld [vmem:[%s241 + $0xbc] sm:$0xf]
        %v380 = vunpack.c.l.b16 %v300
        %v381 = vunpack.c.h.b16 %v300
        %v382 = vunpack.c.l.b16 %v301
        %v383 = vunpack.c.l.b16 %v302
        %v384 = vunpack.c.h.b16 %v302
        %v385 = vunpack.c.l.b16 %v303
        %v386 = vunpack.c.l.b16 %v304
        %v387 = vunpack.c.h.b16 %v304
        %v388 = vunpack.c.l.b16 %v305
        %v389 = vunpack.c.l.b16 %v306
        %v390 = vunpack.c.h.b16 %v306
        %v391 = vunpack.c.l.b16 %v307
        %v392 = vunpack.c.l.b16 %v308
        %v393 = vunpack.c.h.b16 %v308
        %v394 = vunpack.c.l.b16 %v309
        %v395 = vunpack.c.l.b16 %v310
        %v396 = vunpack.c.h.b16 %v310
        %v397 = vunpack.c.l.b16 %v311
        %v398 = vunpack.c.l.b16 %v312
        %v399 = vunpack.c.h.b16 %v312
        %v400 = vunpack.c.l.b16 %v313
        %v401 = vunpack.c.l.b16 %v314
        %v402 = vunpack.c.h.b16 %v314
        %v403 = vunpack.c.l.b16 %v315
        %v404 = vpack.c.b16 %v383, %v380
        %v405 = vpack.c.b16 %v384, %v381
        %v406 = vpack.c.b16 %v385, %v382
        %v407 = vpack.c.b16 %v389, %v386
        %v408 = vpack.c.b16 %v390, %v387
        %v409 = vpack.c.b16 %v391, %v388
        %v410 = vpack.c.b16 %v395, %v392
        %v411 = vpack.c.b16 %v396, %v393
        %v412 = vpack.c.b16 %v397, %v394
        %v413 = vpack.c.b16 %v401, %v398
        %v414 = vpack.c.b16 %v402, %v399
        %v415 = vpack.c.b16 %v403, %v400
        %v476 = vunpack.c.l.b16 %v316
        %v477 = vunpack.c.l.b16 %v317
        %v478 = vunpack.c.l.b16 %v318
        %v479 = vunpack.c.l.b16 %v319
        %v480 = vunpack.c.l.b16 %v320
        %v481 = vunpack.c.l.b16 %v321
        %v482 = vunpack.c.l.b16 %v322
        %v483 = vunpack.c.l.b16 %v323
        %v484 = vunpack.c.l.b16 %v324
        %v485 = vunpack.c.l.b16 %v325
        %v486 = vunpack.c.l.b16 %v326
        %v487 = vunpack.c.l.b16 %v327
        %v488 = vunpack.c.l.b16 %v328
        %v489 = vunpack.c.l.b16 %v329
        %v490 = vunpack.c.l.b16 %v330
        %v491 = vunpack.c.l.b16 %v331
        %v492 = vunpack.c.l.b16 %v332
        %v493 = vunpack.c.l.b16 %v333
        %v494 = vunpack.c.l.b16 %v334
        %v495 = vunpack.c.l.b16 %v335
        %v496 = vunpack.c.l.b16 %v336
        %v497 = vunpack.c.l.b16 %v337
        %v498 = vunpack.c.l.b16 %v338
        %v499 = vunpack.c.l.b16 %v339
        %v500 = vunpack.c.l.b16 %v340
        %v501 = vunpack.c.l.b16 %v341
        %v502 = vunpack.c.l.b16 %v342
        %v503 = vunpack.c.l.b16 %v343
        %v504 = vunpack.c.l.b16 %v344
        %v505 = vunpack.c.l.b16 %v345
        %v506 = vunpack.c.l.b16 %v346
        %v507 = vunpack.c.l.b16 %v347
        %v508 = vunpack.c.l.b16 %v348
        %v509 = vunpack.c.l.b16 %v349
        %v510 = vunpack.c.l.b16 %v350
        %v511 = vunpack.c.l.b16 %v351
        %v512 = vunpack.c.l.b16 %v352
        %v513 = vunpack.c.l.b16 %v353
        %v514 = vunpack.c.l.b16 %v354
        %v515 = vunpack.c.l.b16 %v355
        %v516 = vunpack.c.l.b16 %v356
        %v517 = vunpack.c.l.b16 %v357
        %v518 = vunpack.c.l.b16 %v358
        %v519 = vunpack.c.l.b16 %v359
        %v520 = vunpack.c.l.b16 %v360
        %v521 = vunpack.c.l.b16 %v361
        %v522 = vunpack.c.l.b16 %v362
        %v523 = vunpack.c.l.b16 %v363
        %v524 = vpack.c.b16 %v477, %v476
        %v525 = vpack.c.b16 %v479, %v478
        %v526 = vpack.c.b16 %v481, %v480
        %v527 = vpack.c.b16 %v483, %v482
        %v528 = vpack.c.b16 %v485, %v484
        %v529 = vpack.c.b16 %v487, %v486
        %v530 = vpack.c.b16 %v489, %v488
        %v531 = vpack.c.b16 %v491, %v490
        %v532 = vpack.c.b16 %v493, %v492
        %v533 = vpack.c.b16 %v495, %v494
        %v534 = vpack.c.b16 %v497, %v496
        %v535 = vpack.c.b16 %v499, %v498
        %v536 = vpack.c.b16 %v501, %v500
        %v537 = vpack.c.b16 %v503, %v502
        %v538 = vpack.c.b16 %v505, %v504
        %v539 = vpack.c.b16 %v507, %v506
        %v540 = vpack.c.b16 %v509, %v508
        %v541 = vpack.c.b16 %v511, %v510
        %v542 = vpack.c.b16 %v513, %v512
        %v543 = vpack.c.b16 %v515, %v514
        %v544 = vpack.c.b16 %v517, %v516
        %v545 = vpack.c.b16 %v519, %v518
        %v546 = vpack.c.b16 %v521, %v520
        %v547 = vpack.c.b16 %v523, %v522
        %572 = vmatpush.bf16.msra.mxu0 %v531
        %573 = vmatpush.bf16.msra.mxu0 %v530
        %574 = vmatpush.bf16.msra.mxu0 %v529
        %575 = vmatpush.bf16.msra.mxu0 %v528
        %576 = vmatpush.bf16.msra.mxu0 %v527
        %577 = vmatpush.bf16.msra.mxu0 %v526
        %578 = vmatpush.bf16.msra.mxu0 %v525
        %579 = vmatpush.bf16.msra.mxu0 %v524
        %580 = vmatmul.bf16.gmra.mxu0 %v404
        %v581 = vpop.f32.mrf.mxu0
        %v582 = vadd.f32 0.0, %v581
        %v583 = vpop.f32.mrf.mxu0
        %v584 = vadd.f32 0.0, %v583
        %585 = vmatmul.bf16.gmra.mxu0 %v407
        %v586 = vpop.f32.mrf.mxu0
        %v587 = vadd.f32 0.0, %v586
        %v588 = vpop.f32.mrf.mxu0
        %v589 = vadd.f32 0.0, %v588
        %590 = vmatmul.bf16.gmra.mxu0 %v410
        %v591 = vpop.f32.mrf.mxu0
        %v592 = vadd.f32 0.0, %v591
        %v593 = vpop.f32.mrf.mxu0
        %v594 = vadd.f32 0.0, %v593
        %595 = vmatmul.bf16.gmra.mxu0 %v413
        %v596 = vpop.f32.mrf.mxu0
        %v597 = vadd.f32 0.0, %v596
        %v598 = vpop.f32.mrf.mxu0
        %v599 = vadd.f32 0.0, %v598
        %600 = vdwg.mxu0
        %601 = vmatpush.bf16.msra.mxu0 %v539
        %602 = vmatpush.bf16.msra.mxu0 %v538
        %603 = vmatpush.bf16.msra.mxu0 %v537
        %604 = vmatpush.bf16.msra.mxu0 %v536
        %605 = vmatpush.bf16.msra.mxu0 %v535
        %606 = vmatpush.bf16.msra.mxu0 %v534
        %607 = vmatpush.bf16.msra.mxu0 %v533
        %608 = vmatpush.bf16.msra.mxu0 %v532
        %609 = vmatmul.bf16.gmra.mxu0 %v405
        %v610 = vpop.f32.mrf.mxu0
        %v611 = vadd.f32 %v582, %v610
        %v612 = vpop.f32.mrf.mxu0
        %v613 = vadd.f32 %v584, %v612
        %614 = vmatmul.bf16.gmra.mxu0 %v408
        %v615 = vpop.f32.mrf.mxu0
        %v616 = vadd.f32 %v587, %v615
        %v617 = vpop.f32.mrf.mxu0
        %v618 = vadd.f32 %v589, %v617
        %619 = vmatmul.bf16.gmra.mxu0 %v411
        %v620 = vpop.f32.mrf.mxu0
        %v621 = vadd.f32 %v592, %v620
        %v622 = vpop.f32.mrf.mxu0
        %v623 = vadd.f32 %v594, %v622
        %624 = vmatmul.bf16.gmra.mxu0 %v414
        %v625 = vpop.f32.mrf.mxu0
        %v626 = vadd.f32 %v597, %v625
        %v627 = vpop.f32.mrf.mxu0
        %v628 = vadd.f32 %v599, %v627
        %629 = vdwg.mxu0
        %630 = vmatpush.bf16.msra.mxu0 %v547
        %631 = vmatpush.bf16.msra.mxu0 %v546
        %632 = vmatpush.bf16.msra.mxu0 %v545
        %633 = vmatpush.bf16.msra.mxu0 %v544
        %634 = vmatpush.bf16.msra.mxu0 %v543
        %635 = vmatpush.bf16.msra.mxu0 %v542
        %636 = vmatpush.bf16.msra.mxu0 %v541
        %637 = vmatpush.bf16.msra.mxu0 %v540
        %638 = vmatmul.bf16.gmra.mxu0 %v406
        %v639 = vpop.f32.mrf.mxu0
        %v640 = vadd.f32 %v611, %v639
        %v641 = vpop.f32.mrf.mxu0
        %v642 = vadd.f32 %v613, %v641
        %643 = vmatmul.bf16.gmra.mxu0 %v409
        %v644 = vpop.f32.mrf.mxu0
        %v645 = vadd.f32 %v616, %v644
        %v646 = vpop.f32.mrf.mxu0
        %v647 = vadd.f32 %v618, %v646
        %648 = vmatmul.bf16.gmra.mxu0 %v412
        %v649 = vpop.f32.mrf.mxu0
        %v650 = vadd.f32 %v621, %v649
        %v651 = vpop.f32.mrf.mxu0
        %v652 = vadd.f32 %v623, %v651
        %653 = vmatmul.bf16.gmra.mxu0 %v415
        %v654 = vpop.f32.mrf.mxu0
        %v655 = vadd.f32 %v626, %v654
        %v656 = vpop.f32.mrf.mxu0
        %v657 = vadd.f32 %v628, %v656
        %658 = vdwg.mxu0
        %v659 = vadd.f32 %v292, %v640
        %v660 = vadd.f32 %v293, %v642
        %v661 = vadd.f32 %v294, %v645
        %v662 = vadd.f32 %v295, %v647
        %v663 = vadd.f32 %v296, %v650
        %v664 = vadd.f32 %v297, %v652
        %v665 = vadd.f32 %v298, %v655
        %v666 = vadd.f32 %v299, %v657
        %667 = vst [vmem:[#allocation2] sm:$0xff] %v659
        %668 = vst [vmem:[#allocation2 + $0x8] sm:$0xff] %v660
        %669 = vst [vmem:[#allocation2 + $0x10] sm:$0xff] %v661
        %670 = vst [vmem:[#allocation2 + $0x18] sm:$0xff] %v662
        %671 = vst [vmem:[#allocation2 + $0x20] sm:$0xff] %v663
        %672 = vst [vmem:[#allocation2 + $0x28] sm:$0xff] %v664
        %673 = vst [vmem:[#allocation2 + $0x30] sm:$0xff] %v665
        %674 = vst [vmem:[#allocation2 + $0x38] sm:$0xff] %v666
        %p675 = scmp.eq.s32.totalorder %s30, 2
        // Predicated region
        $region45: #{tpu_custom_call.1} parent=31 // pred_check
          %p676 = pneg %p675
        $region46: #{tpu_custom_call.1} parent=31 // pred_check_branch
          %678 = sbr.rel (%p676) target = $region48
        $region47: #{tpu_custom_call.1} parent=31 // pred_region
          %v679 = vld [vmem:[#allocation2] sm:$0xff]
          %v680 = vld [vmem:[#allocation2 + $0x8] sm:$0xff]
          %v681 = vld [vmem:[#allocation2 + $0x10] sm:$0xff]
          %v682 = vld [vmem:[#allocation2 + $0x18] sm:$0xff]
          %v683 = vld [vmem:[#allocation2 + $0x20] sm:$0xff]
          %v684 = vld [vmem:[#allocation2 + $0x28] sm:$0xff]
          %v685 = vld [vmem:[#allocation2 + $0x30] sm:$0xff]
          %v686 = vld [vmem:[#allocation2 + $0x38] sm:$0xff]
          %v687 = vld [vmem:[%s278] sm:$0x1]
          %v689 = vperm.slane %v687, 0
          %v691 = vadd.f32 %v679, %v689
          %v692 = vadd.f32 %v680, %v689
          %v693 = vadd.f32 %v681, %v689
          %v694 = vadd.f32 %v682, %v689
          %v695 = vadd.f32 %v683, %v689
          %v696 = vadd.f32 %v684, %v689
          %v697 = vadd.f32 %v685, %v689
          %v698 = vadd.f32 %v686, %v689
          %v699 = vmax.f32 %v691, 0.0
          %v700 = vmax.f32 %v692, 0.0
          %v701 = vmax.f32 %v693, 0.0
          %v702 = vmax.f32 %v694, 0.0
          %v703 = vmax.f32 %v695, 0.0
          %v704 = vmax.f32 %v696, 0.0
          %v705 = vmax.f32 %v697, 0.0
          %v706 = vmax.f32 %v698, 0.0
          %v707 = vpack.c.bf16 %v699, %v699
          %v708 = vpack.c.bf16 %v700, %v700
          %v709 = vpack.c.bf16 %v701, %v701
          %v710 = vpack.c.bf16 %v702, %v702
          %v711 = vpack.c.bf16 %v703, %v703
          %v712 = vpack.c.bf16 %v704, %v704
          %v713 = vpack.c.bf16 %v705, %v705
          %v714 = vpack.c.bf16 %v706, %v706
          %715 = vst [vmem:[%s272] sm:$0xf] %v707
          %716 = vst [vmem:[%s272 + $0x4] sm:$0xf] %v708
          %717 = vst [vmem:[%s272 + $0x8] sm:$0xf] %v709
          %718 = vst [vmem:[%s272 + $0xc] sm:$0xf] %v710
          %719 = vst [vmem:[%s272 + $0x10] sm:$0xf] %v711
          %720 = vst [vmem:[%s272 + $0x14] sm:$0xf] %v712
          %721 = vst [vmem:[%s272 + $0x18] sm:$0xf] %v713
          %722 = vst [vmem:[%s272 + $0x1c] sm:$0xf] %v714
        $region48: #{tpu_custom_call.1} parent=31 // pred_fallthru
          _
        %s723 = sand.u32 %s134, 1
        %s724 = scalar_lea.sflag [#allocation5], %s723
        %s725 = sand.u32 %s134, 1
        %s726 = smul.addr %s725, 32
        %s727 = scalar_lea.vmem [#allocation8], %s726
        // Predicated region
        $region49: #{tpu_custom_call.1} parent=31 // pred_check
          %p728 = pneg %p144
        $region50: #{tpu_custom_call.1} parent=31 // pred_check_branch
          %730 = sbr.rel (%p728) target = $region52
        $region51: #{tpu_custom_call.1} parent=31 // pred_region
          %s731 = smul.u32 8, %s28
          %733 = vsyncadd %s724, 0
          %s734 = sadd.s32 %s29, %s731
          %s735 = smul.addr %s734, 4
          %s736 = scalar_lea.hbm %s3, %s735
          %s737 = sshll.u32 %s727, 4
          %s738 = int_to_ptr.vmem [resolvable:$true] %s737
          %s739 = sshll.u32 %s736, 4
          %s740 = int_to_ptr.hbm [resolvable:$true] %s739
          %745 = dma.vmem_to_hbm [thread:$0]  %s738, 512, %s740, %s724, 64, 64, 4
        $region52: #{tpu_custom_call.1} parent=31 // pred_fallthru
          _
      $region32: #{tpu_custom_call.1} parent=5 // pred_fallthru
        _
      %p746 = scmp.le.s32.totalorder 2, %s18
      // Predicated region
      $region53: #{tpu_custom_call.1} parent=5 // pred_check
        %p747 = pneg %p746
      $region54: #{tpu_custom_call.1} parent=5 // pred_check_branch
        %749 = sbr.rel (%p747) target = $region56
      $region55: #{tpu_custom_call.1} parent=5 // pred_region
        %s750 = ssub.s32 %s18, 2
        // Predicated region
        $region57: #{tpu_custom_call.1} parent=55 // pred_check
          %p751 = pneg %p150
        $region58: #{tpu_custom_call.1} parent=55 // pred_check_branch
          %753 = sbr.rel (%p751) target = $region60
        $region59: #{tpu_custom_call.1} parent=55 // pred_region
          %s754 = sand.u32 %s135, 1
          %s755 = scalar_lea.sflag [#allocation5], %s754
          %s756 = sand.u32 %s135, 1
          %s757 = smul.addr %s756, 32
          %s758 = scalar_lea.vmem [#allocation8], %s757
          %760 = dma.done %s755, 512
        $region60: #{tpu_custom_call.1} parent=55 // pred_fallthru
          _
      $region56: #{tpu_custom_call.1} parent=5 // pred_fallthru
        _
    $region6: #{tpu_custom_call.1} parent=1 // loop_footer
      %s22 = sadd.s32 1, %s18
    $region7: #{tpu_custom_call.1} parent=1 // loop_footer_branch
      %17 = sbr.rel target = $region3
    $region8: #{tpu_custom_call.1} parent=1 // loop_exit
      _
    %761 = vsyncpa [#allocation4], 1
    %s762 = scalar_lea.sflag [#allocation4], 1
    %763 = vsyncpa %s762, 1
    %764 = vsyncpa [#allocation7], 1
    %s765 = scalar_lea.sflag [#allocation7], 1
    %766 = vsyncpa %s765, 1
    %767 = vsyncpa [#allocation5], 1
    %s768 = scalar_lea.sflag [#allocation5], 1
    %769 = vsyncpa %s768, 1

</llo_original>
